<compile_context>
chip_gen: v5e
topology: v5e:2x2
jax: 0.10.0
libtpu: 0.0.40
codegen_flags: <defaults>
</compile_context>

<pallas_src>
import jax
import jax.numpy as jnp
from jax.experimental import pallas as pl
from jax.experimental.pallas import tpu as pltpu

EPS = 1e-5

# MXU input dtype for the conv contractions.  Kept f32 so this toy-shape check
# matches the f32 PyTorch reference; at real shapes on v6e/v7x set to
# jnp.bfloat16 (BN sums / all elementwise math stay f32 -- v5e has no bf16 VPU).
CONV_DTYPE = jnp.float32


def resnet_block_kernel(x_ref, w1_ref, g1_ref, b1_ref, w2_ref, g2_ref, b2_ref,
                        o_ref):
    # x_ref  : (N, H, WC)   folded activations, WC = W*C (lane axis)
    # wK_ref : (3*WC, WC)   folded block-tridiagonal conv weights (kh-major)
    # gK/bK  : (1, C)       BN gamma / beta
    # o_ref  : (N, H, WC)   output (lane-dense: last dim = W*C)
    N, H, WC = x_ref.shape
    C = g1_ref.shape[1]
    NH = N * H
    W = WC // C
    inv_cnt = 1.0 / float(NH * W)

    # Hoisted constants (JAX does not CSE broadcast_in_dim -- build them once).
    row = jax.lax.broadcasted_iota(jnp.int32, (NH, 1), 0)
    keep_top = (row % H != 0).astype(jnp.float32)        # zero 1st row / image
    keep_bot = (row % H != H - 1).astype(jnp.float32)    # zero last row / image
    # Folded-lane <-> channel one-hot selectors, generated in-kernel.
    sel = (jax.lax.broadcasted_iota(jnp.int32, (WC, C), 0) % C
           == jax.lax.broadcasted_iota(jnp.int32, (WC, C), 1)
           ).astype(jnp.float32)                         # (WC, C) stats reduce
    selT = (jax.lax.broadcasted_iota(jnp.int32, (C, WC), 1) % C
            == jax.lax.broadcasted_iota(jnp.int32, (C, WC), 0)
            ).astype(jnp.float32)                        # (C, WC) lane expand

    def conv3x3(y2, w_ref):
        # y2: (NH, WC) -> (NH, WC).  Three accumulating MXU dots (one per kh
        # tap); no im2col patches buffer, no padded scratch.
        acc = jnp.dot(y2.astype(CONV_DTYPE), w_ref[pl.ds(WC, WC), :],
                      preferred_element_type=jnp.float32)        # kh = 1
        # kh = 0 tap: output row r reads y[r-1]; the first row of each image
        # sees the zero halo (mask also kills the roll wrap-around).
        up = (pltpu.roll(y2, shift=1, axis=0) * keep_top).astype(CONV_DTYPE)
        acc = acc + jnp.dot(up, w_ref[pl.ds(0, WC), :],
                            preferred_element_type=jnp.float32)
        # kh = 2 tap: output row r reads y[r+1]; last row of each image zeroed.
        dn = (pltpu.roll(y2, shift=NH - 1, axis=0) * keep_bot).astype(CONV_DTYPE)
        acc = acc + jnp.dot(dn, w_ref[pl.ds(2 * WC, WC), :],
                            preferred_element_type=jnp.float32)
        return acc

    def batchnorm(y2, g_ref, b_ref):
        # Single-pass per-channel stats over (N, H, W), all f32.
        s1 = jnp.sum(y2, axis=0, keepdims=True)                  # (1, WC)
        s2 = jnp.sum(y2 * y2, axis=0, keepdims=True)             # (1, WC)
        # One fused (2, WC) @ (WC, C) reduce instead of two M=1 matmuls.
        red = jnp.dot(jnp.concatenate([s1, s2], axis=0), sel,
                      preferred_element_type=jnp.float32) * inv_cnt   # (2, C)
        mean, ex2 = red[0:1, :], red[1:2, :]
        var = ex2 - mean * mean                  # biased variance (BatchNorm2d)
        scale = g_ref[...] * jax.lax.rsqrt(var + EPS)            # (1, C)
        bias = b_ref[...] - mean * scale                         # (1, C)
        # One fused (2, C) @ (C, WC) lane expansion instead of two.
        sb = jnp.dot(jnp.concatenate([scale, bias], axis=0), selT,
                     preferred_element_type=jnp.float32)         # (2, WC)
        return y2 * sb[0:1, :] + sb[1:2, :]                      # fused mul-add

    out = conv3x3(x_ref[...].reshape(NH, WC), w1_ref)
    out = jnp.maximum(batchnorm(out, g1_ref, b1_ref), 0.0)       # ReLU
    out = conv3x3(out, w2_ref)
    out = batchnorm(out, g2_ref, b2_ref)
    # Residual: re-read x from VMEM here instead of keeping it live across
    # both convs / BNs (cheap vld; lowers vreg pressure at larger row tiles).
    out = out + x_ref[...].reshape(NH, WC)
    o_ref[...] = jnp.maximum(out, 0.0).reshape(N, H, WC)         # + x -> ReLU


def _fold_conv_weight(wt_oihw, W):
    """PyTorch (Cout, Cin, 3, 3) -> folded im2col weight (3*W*C, W*C).

    Wfold[kh*W*C + w_in*C + ci, w_out*C + co] = wt[co, ci, kh, w_in - w_out + 1]
    when |w_in - w_out| <= 1, else 0 -- i.e. the conv's W-direction zero padding
    is encoded as the missing blocks of a block-tridiagonal matrix.
    """
    Cout, Cin, KH, KW = wt_oihw.shape
    C = Cin
    WC = W * C
    wt_t = jnp.transpose(wt_oihw, (2, 3, 1, 0)).astype(jnp.float32)  # (kh,kw,ci,co)
    idx = jnp.arange(WC)
    w_in, ci = idx // C, idx % C
    w_out, co = idx // C, idx % C
    kw = w_in[:, None] - w_out[None, :] + 1                    # (WC, WC)
    valid = (kw >= 0) & (kw <= KW - 1)
    kw_c = jnp.clip(kw, 0, KW - 1)
    g = wt_t[:, kw_c, ci[:, None], co[None, :]]                # (KH, WC, WC)
    folded = jnp.where(valid[None], g, 0.0)
    return folded.reshape(KH * WC, WC)


@jax.jit
def resnet_block(x_nchw, w1, gamma1, beta1, w2, gamma2, beta2):
    """x_nchw: (N, C, H, W) f32; w1/w2: (C, C, 3, 3) PyTorch OIHW layout.

    The NCHW <-> folded-(N, H, W*C) transposes below exist only to match the
    PyTorch interface; in a real pipeline activations would stay folded
    between blocks and the weights would be folded once at load time.
    """
    N, C, H, W = x_nchw.shape
    WC = W * C
    x_f = jnp.transpose(x_nchw, (0, 2, 3, 1)).reshape(N, H, WC).astype(jnp.float32)
    w1f = _fold_conv_weight(w1, W).astype(CONV_DTYPE)
    w2f = _fold_conv_weight(w2, W).astype(CONV_DTYPE)
    g1 = gamma1.reshape(1, C).astype(jnp.float32)
    b1 = beta1.reshape(1, C).astype(jnp.float32)
    g2 = gamma2.reshape(1, C).astype(jnp.float32)
    b2 = beta2.reshape(1, C).astype(jnp.float32)

    out_f = pl.pallas_call(
        resnet_block_kernel,
        out_shape=jax.ShapeDtypeStruct((N, H, WC), jnp.float32),
        in_specs=[pl.BlockSpec(memory_space=pltpu.MemorySpace.VMEM)] * 7,
        out_specs=pl.BlockSpec(memory_space=pltpu.MemorySpace.VMEM),
    )(x_f, w1f, g1, b1, w2f, g2, b2)

    return jnp.transpose(out_f.reshape(N, H, W, C), (0, 3, 1, 2))


def reference_block(x, w1, g1, b1, w2, g2, b2):
    """Pure-JAX reference mirroring the PyTorch module (NCHW)."""
    def conv(x, w):
        return jax.lax.conv_general_dilated(
            x, w, window_strides=(1, 1), padding="SAME",
            dimension_numbers=("NCHW", "OIHW", "NCHW"))

    def bn(y, g, b):
        mean = jnp.mean(y, axis=(0, 2, 3), keepdims=True)
        var = jnp.mean((y - mean) ** 2, axis=(0, 2, 3), keepdims=True)
        yhat = (y - mean) * jax.lax.rsqrt(var + EPS)
        return yhat * g.reshape(1, -1, 1, 1) + b.reshape(1, -1, 1, 1)

    out = jax.nn.relu(bn(conv(x, w1), g1, b1))
    out = bn(conv(out, w2), g2, b2)
    return jax.nn.relu(out + x)


if __name__ == "__main__":
    N, C, H, W = 2, 8, 16, 16   # W*C = 128 -> fully lane-dense folded layout

    key = jax.random.PRNGKey(0)
    k_x, k_w1, k_w2, k_g1, k_b1, k_g2, k_b2 = jax.random.split(key, 7)

    x = jax.random.normal(k_x, (N, C, H, W), dtype=jnp.float32)
    w1 = jax.random.normal(k_w1, (C, C, 3, 3), dtype=jnp.float32) * 0.1
    w2 = jax.random.normal(k_w2, (C, C, 3, 3), dtype=jnp.float32) * 0.1
    gamma1 = 1.0 + 0.1 * jax.random.normal(k_g1, (C,), dtype=jnp.float32)
    beta1 = 0.1 * jax.random.normal(k_b1, (C,), dtype=jnp.float32)
    gamma2 = 1.0 + 0.1 * jax.random.normal(k_g2, (C,), dtype=jnp.float32)
    beta2 = 0.1 * jax.random.normal(k_b2, (C,), dtype=jnp.float32)

    out = resnet_block(x, w1, gamma1, beta1, w2, gamma2, beta2)
    out = jax.block_until_ready(out)

    ref = jax.block_until_ready(
        reference_block(x, w1, gamma1, beta1, w2, gamma2, beta2))

    assert out.shape == (N, C, H, W), out.shape
    assert jnp.allclose(out, ref, atol=1e-3, rtol=1e-3), (
        float(jnp.max(jnp.abs(out - ref))))

    print("KERNEL_OK")
</pallas_src>

<mosaic_0001>
module attributes {stable_mosaic.version = 11 : i64} {
  func.func @resnet_block_kernel(%arg0: memref<2x16x128xf32, #tpu.memory_space<vmem>>, %arg1: memref<384x128xf32, #tpu.memory_space<vmem>>, %arg2: memref<1x8xf32, #tpu.memory_space<vmem>>, %arg3: memref<1x8xf32, #tpu.memory_space<vmem>>, %arg4: memref<384x128xf32, #tpu.memory_space<vmem>>, %arg5: memref<1x8xf32, #tpu.memory_space<vmem>>, %arg6: memref<1x8xf32, #tpu.memory_space<vmem>>, %arg7: memref<2x16x128xf32, #tpu.memory_space<vmem>>) attributes {dimension_semantics = [], scalar_prefetch = 0 : i64, scratch_operands = 0 : i64, tpu.core_type = #tpu.core_type<tc>} {
    %0 = tpu.iota {dimensions = array<i32: 0>} : vector<32x1xi32>
    %c16_i32 = arith.constant 16 : i32
    %c0_i32 = arith.constant 0 : i32
    %1 = arith.cmpi eq, %c16_i32, %c0_i32 : i32
    %c1_i32 = arith.constant 1 : i32
    %2 = arith.select %1, %c1_i32, %c16_i32 : i32
    %3 = vector.broadcast %2 : i32 to vector<32x1xi32>
    %4 = arith.remsi %0, %3 : vector<32x1xi32>
    %c0_i32_0 = arith.constant 0 : i32
    %5 = vector.broadcast %c0_i32_0 : i32 to vector<32x1xi32>
    %6 = arith.cmpi ne, %4, %5 : vector<32x1xi32>
    %c0_i32_1 = arith.constant 0 : i32
    %7 = vector.broadcast %c0_i32_1 : i32 to vector<32x1xi32>
    %8 = arith.cmpi slt, %4, %7 : vector<32x1xi32>
    %c0_i32_2 = arith.constant 0 : i32
    %9 = arith.cmpi slt, %2, %c0_i32_2 : i32
    %10 = vector.broadcast %9 : i1 to vector<32x1xi1>
    %11 = vector.broadcast %10 : vector<32x1xi1> to vector<32x1xi1>
    %12 = arith.xori %8, %11 : vector<32x1xi1>
    %13 = arith.andi %12, %6 : vector<32x1xi1>
    %14 = vector.broadcast %2 : i32 to vector<32x1xi32>
    %15 = arith.addi %4, %14 : vector<32x1xi32>
    %16 = arith.select %13, %15, %4 : vector<32x1xi1>, vector<32x1xi32>
    %c0_i32_3 = arith.constant 0 : i32
    %17 = vector.broadcast %c0_i32_3 : i32 to vector<32x1xi32>
    %18 = arith.cmpi ne, %16, %17 : vector<32x1xi32>
    %19 = arith.extui %18 : vector<32x1xi1> to vector<32x1xi32>
    %20 = arith.sitofp %19 : vector<32x1xi32> to vector<32x1xf32>
    %c16_i32_4 = arith.constant 16 : i32
    %c0_i32_5 = arith.constant 0 : i32
    %21 = arith.cmpi eq, %c16_i32_4, %c0_i32_5 : i32
    %c1_i32_6 = arith.constant 1 : i32
    %22 = arith.select %21, %c1_i32_6, %c16_i32_4 : i32
    %23 = vector.broadcast %22 : i32 to vector<32x1xi32>
    %24 = arith.remsi %0, %23 : vector<32x1xi32>
    %c0_i32_7 = arith.constant 0 : i32
    %25 = vector.broadcast %c0_i32_7 : i32 to vector<32x1xi32>
    %26 = arith.cmpi ne, %24, %25 : vector<32x1xi32>
    %c0_i32_8 = arith.constant 0 : i32
    %27 = vector.broadcast %c0_i32_8 : i32 to vector<32x1xi32>
    %28 = arith.cmpi slt, %24, %27 : vector<32x1xi32>
    %c0_i32_9 = arith.constant 0 : i32
    %29 = arith.cmpi slt, %22, %c0_i32_9 : i32
    %30 = vector.broadcast %29 : i1 to vector<32x1xi1>
    %31 = vector.broadcast %30 : vector<32x1xi1> to vector<32x1xi1>
    %32 = arith.xori %28, %31 : vector<32x1xi1>
    %33 = arith.andi %32, %26 : vector<32x1xi1>
    %34 = vector.broadcast %22 : i32 to vector<32x1xi32>
    %35 = arith.addi %24, %34 : vector<32x1xi32>
    %36 = arith.select %33, %35, %24 : vector<32x1xi1>, vector<32x1xi32>
    %c15_i32 = arith.constant 15 : i32
    %37 = vector.broadcast %c15_i32 : i32 to vector<32x1xi32>
    %38 = arith.cmpi ne, %36, %37 : vector<32x1xi32>
    %39 = arith.extui %38 : vector<32x1xi1> to vector<32x1xi32>
    %40 = arith.sitofp %39 : vector<32x1xi32> to vector<32x1xf32>
    %41 = tpu.iota {dimensions = array<i32: 0>} : vector<128x8xi32>
    %c8_i32 = arith.constant 8 : i32
    %c0_i32_10 = arith.constant 0 : i32
    %42 = arith.cmpi eq, %c8_i32, %c0_i32_10 : i32
    %c1_i32_11 = arith.constant 1 : i32
    %43 = arith.select %42, %c1_i32_11, %c8_i32 : i32
    %44 = vector.broadcast %43 : i32 to vector<128x8xi32>
    %45 = arith.remsi %41, %44 : vector<128x8xi32>
    %c0_i32_12 = arith.constant 0 : i32
    %46 = vector.broadcast %c0_i32_12 : i32 to vector<128x8xi32>
    %47 = arith.cmpi ne, %45, %46 : vector<128x8xi32>
    %c0_i32_13 = arith.constant 0 : i32
    %48 = vector.broadcast %c0_i32_13 : i32 to vector<128x8xi32>
    %49 = arith.cmpi slt, %45, %48 : vector<128x8xi32>
    %c0_i32_14 = arith.constant 0 : i32
    %50 = arith.cmpi slt, %43, %c0_i32_14 : i32
    %51 = vector.broadcast %50 : i1 to vector<128x8xi1>
    %52 = vector.broadcast %51 : vector<128x8xi1> to vector<128x8xi1>
    %53 = arith.xori %49, %52 : vector<128x8xi1>
    %54 = arith.andi %53, %47 : vector<128x8xi1>
    %55 = vector.broadcast %43 : i32 to vector<128x8xi32>
    %56 = arith.addi %45, %55 : vector<128x8xi32>
    %57 = arith.select %54, %56, %45 : vector<128x8xi1>, vector<128x8xi32>
    %58 = tpu.iota {dimensions = array<i32: 1>} : vector<128x8xi32>
    %59 = arith.cmpi eq, %57, %58 : vector<128x8xi32>
    %60 = arith.extui %59 : vector<128x8xi1> to vector<128x8xi32>
    %61 = arith.sitofp %60 : vector<128x8xi32> to vector<128x8xf32>
    %62 = tpu.iota {dimensions = array<i32: 1>} : vector<8x128xi32>
    %c8_i32_15 = arith.constant 8 : i32
    %c0_i32_16 = arith.constant 0 : i32
    %63 = arith.cmpi eq, %c8_i32_15, %c0_i32_16 : i32
    %c1_i32_17 = arith.constant 1 : i32
    %64 = arith.select %63, %c1_i32_17, %c8_i32_15 : i32
    %65 = vector.broadcast %64 : i32 to vector<8x128xi32>
    %66 = arith.remsi %62, %65 : vector<8x128xi32>
    %c0_i32_18 = arith.constant 0 : i32
    %67 = vector.broadcast %c0_i32_18 : i32 to vector<8x128xi32>
    %68 = arith.cmpi ne, %66, %67 : vector<8x128xi32>
    %c0_i32_19 = arith.constant 0 : i32
    %69 = vector.broadcast %c0_i32_19 : i32 to vector<8x128xi32>
    %70 = arith.cmpi slt, %66, %69 : vector<8x128xi32>
    %c0_i32_20 = arith.constant 0 : i32
    %71 = arith.cmpi slt, %64, %c0_i32_20 : i32
    %72 = vector.broadcast %71 : i1 to vector<8x128xi1>
    %73 = vector.broadcast %72 : vector<8x128xi1> to vector<8x128xi1>
    %74 = arith.xori %70, %73 : vector<8x128xi1>
    %75 = arith.andi %74, %68 : vector<8x128xi1>
    %76 = vector.broadcast %64 : i32 to vector<8x128xi32>
    %77 = arith.addi %66, %76 : vector<8x128xi32>
    %78 = arith.select %75, %77, %66 : vector<8x128xi1>, vector<8x128xi32>
    %79 = tpu.iota {dimensions = array<i32: 0>} : vector<8x128xi32>
    %80 = arith.cmpi eq, %78, %79 : vector<8x128xi32>
    %81 = arith.extui %80 : vector<8x128xi1> to vector<8x128xi32>
    %82 = arith.sitofp %81 : vector<8x128xi32> to vector<8x128xf32>
    %c0 = arith.constant 0 : index
    %c0_21 = arith.constant 0 : index
    %c0_22 = arith.constant 0 : index
    %83 = vector.load %arg0[%c0, %c0_21, %c0_22] : memref<2x16x128xf32, #tpu.memory_space<vmem>>, vector<2x16x128xf32>
    %84 = vector.shape_cast %83 : vector<2x16x128xf32> to vector<32x128xf32>
    %c128 = arith.constant 128 : index
    %c0_23 = arith.constant 0 : index
    %85 = vector.load %arg1[%c128, %c0_23] : memref<384x128xf32, #tpu.memory_space<vmem>>, vector<128x128xf32>
    %cst = arith.constant dense<0.000000e+00> : vector<32x128xf32>
    %86 = tpu.matmul %84, %85, %cst {dimension_numbers = #tpu.dot_dimension_numbers<[1], [0], [0], [1], [0, 0, 1, 1], [], []>} : vector<32x128xf32>, vector<128x128xf32>, vector<32x128xf32> -> vector<32x128xf32>
    %c1_i32_24 = arith.constant 1 : i32
    %87 = tpu.dynamic_rotate %84 by %c1_i32_24 dim 0 : vector<32x128xf32>, i32 -> vector<32x128xf32>
    %88 = vector.broadcast %20 : vector<32x1xf32> to vector<32x128xf32>
    %89 = arith.mulf %87, %88 : vector<32x128xf32>
    %c0_25 = arith.constant 0 : index
    %c0_26 = arith.constant 0 : index
    %90 = vector.load %arg1[%c0_25, %c0_26] : memref<384x128xf32, #tpu.memory_space<vmem>>, vector<128x128xf32>
    %cst_27 = arith.constant dense<0.000000e+00> : vector<32x128xf32>
    %91 = tpu.matmul %89, %90, %cst_27 {dimension_numbers = #tpu.dot_dimension_numbers<[1], [0], [0], [1], [0, 0, 1, 1], [], []>} : vector<32x128xf32>, vector<128x128xf32>, vector<32x128xf32> -> vector<32x128xf32>
    %92 = arith.addf %86, %91 : vector<32x128xf32>
    %c31_i32 = arith.constant 31 : i32
    %93 = tpu.dynamic_rotate %84 by %c31_i32 dim 0 : vector<32x128xf32>, i32 -> vector<32x128xf32>
    %94 = vector.broadcast %40 : vector<32x1xf32> to vector<32x128xf32>
    %95 = arith.mulf %93, %94 : vector<32x128xf32>
    %c256 = arith.constant 256 : index
    %c0_28 = arith.constant 0 : index
    %96 = vector.load %arg1[%c256, %c0_28] : memref<384x128xf32, #tpu.memory_space<vmem>>, vector<128x128xf32>
    %cst_29 = arith.constant dense<0.000000e+00> : vector<32x128xf32>
    %97 = tpu.matmul %95, %96, %cst_29 {dimension_numbers = #tpu.dot_dimension_numbers<[1], [0], [0], [1], [0, 0, 1, 1], [], []>} : vector<32x128xf32>, vector<128x128xf32>, vector<32x128xf32> -> vector<32x128xf32>
    %98 = arith.addf %92, %97 : vector<32x128xf32>
    %cst_30 = arith.constant dense<0.000000e+00> : vector<128xf32>
    %99 = vector.multi_reduction <add>, %98, %cst_30 [0] : vector<32x128xf32> to vector<128xf32>
    %100 = vector.shape_cast %99 : vector<128xf32> to vector<1x128xf32>
    %101 = arith.mulf %98, %98 : vector<32x128xf32>
    %cst_31 = arith.constant dense<0.000000e+00> : vector<128xf32>
    %102 = vector.multi_reduction <add>, %101, %cst_31 [0] : vector<32x128xf32> to vector<128xf32>
    %103 = vector.shape_cast %102 : vector<128xf32> to vector<1x128xf32>
    %104 = tpu.concatenate %100, %103 in 0 : vector<1x128xf32>, vector<1x128xf32> -> vector<2x128xf32>
    %cst_32 = arith.constant dense<0.000000e+00> : vector<2x8xf32>
    %105 = tpu.matmul %104, %61, %cst_32 {dimension_numbers = #tpu.dot_dimension_numbers<[1], [0], [0], [1], [0, 0, 1, 1], [], []>} : vector<2x128xf32>, vector<128x8xf32>, vector<2x8xf32> -> vector<2x8xf32>
    %cst_33 = arith.constant 0.001953125 : f32
    %106 = vector.broadcast %cst_33 : f32 to vector<2x8xf32>
    %107 = arith.mulf %105, %106 : vector<2x8xf32>
    %108 = vector.extract_strided_slice %107 {offsets = [0, 0], sizes = [1, 8], strides = [1, 1]} : vector<2x8xf32> to vector<1x8xf32>
    %109 = vector.extract_strided_slice %107 {offsets = [1, 0], sizes = [1, 8], strides = [1, 1]} : vector<2x8xf32> to vector<1x8xf32>
    %110 = arith.mulf %108, %108 : vector<1x8xf32>
    %111 = arith.subf %109, %110 : vector<1x8xf32>
    %c0_34 = arith.constant 0 : index
    %c0_35 = arith.constant 0 : index
    %112 = vector.load %arg2[%c0_34, %c0_35] : memref<1x8xf32, #tpu.memory_space<vmem>>, vector<1x8xf32>
    %cst_36 = arith.constant 9.99999974E-6 : f32
    %113 = vector.broadcast %cst_36 : f32 to vector<1x8xf32>
    %114 = arith.addf %111, %113 : vector<1x8xf32>
    %115 = math.rsqrt %114 : vector<1x8xf32>
    %116 = arith.mulf %112, %115 : vector<1x8xf32>
    %c0_37 = arith.constant 0 : index
    %c0_38 = arith.constant 0 : index
    %117 = vector.load %arg3[%c0_37, %c0_38] : memref<1x8xf32, #tpu.memory_space<vmem>>, vector<1x8xf32>
    %118 = arith.mulf %108, %116 : vector<1x8xf32>
    %119 = arith.subf %117, %118 : vector<1x8xf32>
    %120 = tpu.concatenate %116, %119 in 0 : vector<1x8xf32>, vector<1x8xf32> -> vector<2x8xf32>
    %cst_39 = arith.constant dense<0.000000e+00> : vector<2x128xf32>
    %121 = tpu.matmul %120, %82, %cst_39 {dimension_numbers = #tpu.dot_dimension_numbers<[1], [0], [0], [1], [0, 0, 1, 1], [], []>} : vector<2x8xf32>, vector<8x128xf32>, vector<2x128xf32> -> vector<2x128xf32>
    %122 = vector.extract_strided_slice %121 {offsets = [0, 0], sizes = [1, 128], strides = [1, 1]} : vector<2x128xf32> to vector<1x128xf32>
    %123 = vector.broadcast %122 : vector<1x128xf32> to vector<32x128xf32>
    %124 = arith.mulf %98, %123 : vector<32x128xf32>
    %125 = vector.extract_strided_slice %121 {offsets = [1, 0], sizes = [1, 128], strides = [1, 1]} : vector<2x128xf32> to vector<1x128xf32>
    %126 = vector.broadcast %125 : vector<1x128xf32> to vector<32x128xf32>
    %127 = arith.addf %124, %126 : vector<32x128xf32>
    %cst_40 = arith.constant 0.000000e+00 : f32
    %128 = vector.broadcast %cst_40 : f32 to vector<32x128xf32>
    %129 = arith.maximumf %127, %128 : vector<32x128xf32>
    %c128_41 = arith.constant 128 : index
    %c0_42 = arith.constant 0 : index
    %130 = vector.load %arg4[%c128_41, %c0_42] : memref<384x128xf32, #tpu.memory_space<vmem>>, vector<128x128xf32>
    %cst_43 = arith.constant dense<0.000000e+00> : vector<32x128xf32>
    %131 = tpu.matmul %129, %130, %cst_43 {dimension_numbers = #tpu.dot_dimension_numbers<[1], [0], [0], [1], [0, 0, 1, 1], [], []>} : vector<32x128xf32>, vector<128x128xf32>, vector<32x128xf32> -> vector<32x128xf32>
    %c1_i32_44 = arith.constant 1 : i32
    %132 = tpu.dynamic_rotate %129 by %c1_i32_44 dim 0 : vector<32x128xf32>, i32 -> vector<32x128xf32>
    %133 = vector.broadcast %20 : vector<32x1xf32> to vector<32x128xf32>
    %134 = arith.mulf %132, %133 : vector<32x128xf32>
    %c0_45 = arith.constant 0 : index
    %c0_46 = arith.constant 0 : index
    %135 = vector.load %arg4[%c0_45, %c0_46] : memref<384x128xf32, #tpu.memory_space<vmem>>, vector<128x128xf32>
    %cst_47 = arith.constant dense<0.000000e+00> : vector<32x128xf32>
    %136 = tpu.matmul %134, %135, %cst_47 {dimension_numbers = #tpu.dot_dimension_numbers<[1], [0], [0], [1], [0, 0, 1, 1], [], []>} : vector<32x128xf32>, vector<128x128xf32>, vector<32x128xf32> -> vector<32x128xf32>
    %137 = arith.addf %131, %136 : vector<32x128xf32>
    %c31_i32_48 = arith.constant 31 : i32
    %138 = tpu.dynamic_rotate %129 by %c31_i32_48 dim 0 : vector<32x128xf32>, i32 -> vector<32x128xf32>
    %139 = vector.broadcast %40 : vector<32x1xf32> to vector<32x128xf32>
    %140 = arith.mulf %138, %139 : vector<32x128xf32>
    %c256_49 = arith.constant 256 : index
    %c0_50 = arith.constant 0 : index
    %141 = vector.load %arg4[%c256_49, %c0_50] : memref<384x128xf32, #tpu.memory_space<vmem>>, vector<128x128xf32>
    %cst_51 = arith.constant dense<0.000000e+00> : vector<32x128xf32>
    %142 = tpu.matmul %140, %141, %cst_51 {dimension_numbers = #tpu.dot_dimension_numbers<[1], [0], [0], [1], [0, 0, 1, 1], [], []>} : vector<32x128xf32>, vector<128x128xf32>, vector<32x128xf32> -> vector<32x128xf32>
    %143 = arith.addf %137, %142 : vector<32x128xf32>
    %cst_52 = arith.constant dense<0.000000e+00> : vector<128xf32>
    %144 = vector.multi_reduction <add>, %143, %cst_52 [0] : vector<32x128xf32> to vector<128xf32>
    %145 = vector.shape_cast %144 : vector<128xf32> to vector<1x128xf32>
    %146 = arith.mulf %143, %143 : vector<32x128xf32>
    %cst_53 = arith.constant dense<0.000000e+00> : vector<128xf32>
    %147 = vector.multi_reduction <add>, %146, %cst_53 [0] : vector<32x128xf32> to vector<128xf32>
    %148 = vector.shape_cast %147 : vector<128xf32> to vector<1x128xf32>
    %149 = tpu.concatenate %145, %148 in 0 : vector<1x128xf32>, vector<1x128xf32> -> vector<2x128xf32>
    %cst_54 = arith.constant dense<0.000000e+00> : vector<2x8xf32>
    %150 = tpu.matmul %149, %61, %cst_54 {dimension_numbers = #tpu.dot_dimension_numbers<[1], [0], [0], [1], [0, 0, 1, 1], [], []>} : vector<2x128xf32>, vector<128x8xf32>, vector<2x8xf32> -> vector<2x8xf32>
    %cst_55 = arith.constant 0.001953125 : f32
    %151 = vector.broadcast %cst_55 : f32 to vector<2x8xf32>
    %152 = arith.mulf %150, %151 : vector<2x8xf32>
    %153 = vector.extract_strided_slice %152 {offsets = [0, 0], sizes = [1, 8], strides = [1, 1]} : vector<2x8xf32> to vector<1x8xf32>
    %154 = vector.extract_strided_slice %152 {offsets = [1, 0], sizes = [1, 8], strides = [1, 1]} : vector<2x8xf32> to vector<1x8xf32>
    %155 = arith.mulf %153, %153 : vector<1x8xf32>
    %156 = arith.subf %154, %155 : vector<1x8xf32>
    %c0_56 = arith.constant 0 : index
    %c0_57 = arith.constant 0 : index
    %157 = vector.load %arg5[%c0_56, %c0_57] : memref<1x8xf32, #tpu.memory_space<vmem>>, vector<1x8xf32>
    %cst_58 = arith.constant 9.99999974E-6 : f32
    %158 = vector.broadcast %cst_58 : f32 to vector<1x8xf32>
    %159 = arith.addf %156, %158 : vector<1x8xf32>
    %160 = math.rsqrt %159 : vector<1x8xf32>
    %161 = arith.mulf %157, %160 : vector<1x8xf32>
    %c0_59 = arith.constant 0 : index
    %c0_60 = arith.constant 0 : index
    %162 = vector.load %arg6[%c0_59, %c0_60] : memref<1x8xf32, #tpu.memory_space<vmem>>, vector<1x8xf32>
    %163 = arith.mulf %153, %161 : vector<1x8xf32>
    %164 = arith.subf %162, %163 : vector<1x8xf32>
    %165 = tpu.concatenate %161, %164 in 0 : vector<1x8xf32>, vector<1x8xf32> -> vector<2x8xf32>
    %cst_61 = arith.constant dense<0.000000e+00> : vector<2x128xf32>
    %166 = tpu.matmul %165, %82, %cst_61 {dimension_numbers = #tpu.dot_dimension_numbers<[1], [0], [0], [1], [0, 0, 1, 1], [], []>} : vector<2x8xf32>, vector<8x128xf32>, vector<2x128xf32> -> vector<2x128xf32>
    %167 = vector.extract_strided_slice %166 {offsets = [0, 0], sizes = [1, 128], strides = [1, 1]} : vector<2x128xf32> to vector<1x128xf32>
    %168 = vector.broadcast %167 : vector<1x128xf32> to vector<32x128xf32>
    %169 = arith.mulf %143, %168 : vector<32x128xf32>
    %170 = vector.extract_strided_slice %166 {offsets = [1, 0], sizes = [1, 128], strides = [1, 1]} : vector<2x128xf32> to vector<1x128xf32>
    %171 = vector.broadcast %170 : vector<1x128xf32> to vector<32x128xf32>
    %172 = arith.addf %169, %171 : vector<32x128xf32>
    %c0_62 = arith.constant 0 : index
    %c0_63 = arith.constant 0 : index
    %c0_64 = arith.constant 0 : index
    %173 = vector.load %arg0[%c0_62, %c0_63, %c0_64] : memref<2x16x128xf32, #tpu.memory_space<vmem>>, vector<2x16x128xf32>
    %174 = vector.shape_cast %173 : vector<2x16x128xf32> to vector<32x128xf32>
    %175 = arith.addf %172, %174 : vector<32x128xf32>
    %cst_65 = arith.constant 0.000000e+00 : f32
    %176 = vector.broadcast %cst_65 : f32 to vector<32x128xf32>
    %177 = arith.maximumf %175, %176 : vector<32x128xf32>
    %178 = vector.shape_cast %177 : vector<32x128xf32> to vector<2x16x128xf32>
    %c0_66 = arith.constant 0 : index
    %c0_67 = arith.constant 0 : index
    %c0_68 = arith.constant 0 : index
    %179 = vector.load %arg7[%c0_66, %c0_67, %c0_68] : memref<2x16x128xf32, #tpu.memory_space<vmem>>, vector<2x16x128xf32>
    tpu.vector_store %arg7[%c0_66, %c0_67, %c0_68], %178 {strides = array<i32>} : memref<2x16x128xf32, #tpu.memory_space<vmem>>, vector<2x16x128xf32>,
    return
  }
}

</mosaic_0001>

<llo_original>
// kernel: resnet_block.1
$region0: #{resnet_block.1}
  #allocation0 [shape = 'u32[]', space=smem, size = 0x4, offset = 0x4, fixed_abs, tag = 'smem constant byte address 0x4 - core index']
  #allocation1 [shape = 'u32[72,128]{1,0:T(1,128)}', space=vmem, size = 0x9000, scoped, tag = 'internal scratch']
  %s0 = inlined_call_operand.vmem [shape: f32[2,16,128], index: 0, kind: input, shape index: {}]
  %s1 = inlined_call_operand.vmem [shape: f32[384,128], index: 1, kind: input, shape index: {}]
  %s2 = inlined_call_operand.vmem [shape: f32[1,8], index: 2, kind: input, shape index: {}]
  %s3 = inlined_call_operand.vmem [shape: f32[1,8], index: 3, kind: input, shape index: {}]
  %s4 = inlined_call_operand.vmem [shape: f32[384,128], index: 4, kind: input, shape index: {}]
  %s5 = inlined_call_operand.vmem [shape: f32[1,8], index: 5, kind: input, shape index: {}]
  %s6 = inlined_call_operand.vmem [shape: f32[1,8], index: 6, kind: input, shape index: {}]
  %s7 = inlined_call_operand.vmem [shape: f32[2,16,128], index: 7, kind: output, shape index: {}]
  %s8 = sld [smem:[#allocation0]]
  $region38: #{resnet_block.1} parent=0
    _
  %s10 = ssub.s32 1, %s8
  %s11 = scalar_select 0, %s10, %s8
  // Predicated region
  $region2: #{resnet_block.1} parent=0 // pred_check
    _
  $region3: #{resnet_block.1} parent=0 // pred_check_branch
    %13 = sbr.rel (0) target = $region5
  $region4: #{resnet_block.1} parent=0 // pred_region
    _
  $region5: #{resnet_block.1} parent=0 // pred_fallthru
    _
  // Predicated region
  $region6: #{resnet_block.1} parent=0 // pred_check
    _
  $region7: #{resnet_block.1} parent=0 // pred_check_branch
    %15 = sbr.rel (0) target = $region9
  $region8: #{resnet_block.1} parent=0 // pred_region
    _
  $region9: #{resnet_block.1} parent=0 // pred_fallthru
    _
  // Predicated region
  $region10: #{resnet_block.1} parent=0 // pred_check
    _
  $region11: #{resnet_block.1} parent=0 // pred_check_branch
    %17 = sbr.rel (0) target = $region13
  $region12: #{resnet_block.1} parent=0 // pred_region
    _
  $region13: #{resnet_block.1} parent=0 // pred_fallthru
    _
  // Predicated region
  $region14: #{resnet_block.1} parent=0 // pred_check
    _
  $region15: #{resnet_block.1} parent=0 // pred_check_branch
    %19 = sbr.rel (0) target = $region17
  $region16: #{resnet_block.1} parent=0 // pred_region
    _
  $region17: #{resnet_block.1} parent=0 // pred_fallthru
    _
  // Predicated region
  $region18: #{resnet_block.1} parent=0 // pred_check
    _
  $region19: #{resnet_block.1} parent=0 // pred_check_branch
    %21 = sbr.rel (0) target = $region21
  $region20: #{resnet_block.1} parent=0 // pred_region
    _
  $region21: #{resnet_block.1} parent=0 // pred_fallthru
    _
  // Predicated region
  $region22: #{resnet_block.1} parent=0 // pred_check
    _
  $region23: #{resnet_block.1} parent=0 // pred_check_branch
    %23 = sbr.rel (0) target = $region25
  $region24: #{resnet_block.1} parent=0 // pred_region
    _
  $region25: #{resnet_block.1} parent=0 // pred_fallthru
    _
  // Predicated region
  $region26: #{resnet_block.1} parent=0 // pred_check
    _
  $region27: #{resnet_block.1} parent=0 // pred_check_branch
    %25 = sbr.rel (0) target = $region29
  $region28: #{resnet_block.1} parent=0 // pred_region
    _
  $region29: #{resnet_block.1} parent=0 // pred_fallthru
    _
  %v26 = vlaneseq
  %v27 = vshrl.u32 %v26, 7
  %v28 = vadd.s32 %v27, 8
  %v29 = vadd.s32 %v27, 16
  %v30 = vadd.s32 %v27, 24
  %vm31 = vcmp.lt.s32.totalorder %v27, 0
  %v32 = vsub.s32 0, %v27
  %v33 = vsel %vm31, %v32, %v27
  %v34 = vshrl.u32 %v33, 4
  %v35 = vand.u32 %v33, 15
  %v36 = vsub.s32 0, %v35
  %v37 = vsel %vm31, %v36, %v35
  %vm38 = vcmp.lt.s32.totalorder %v28, 0
  %v39 = vsub.s32 0, %v28
  %v40 = vsel %vm38, %v39, %v28
  %v41 = vshrl.u32 %v40, 4
  %v42 = vand.u32 %v40, 15
  %v43 = vsub.s32 0, %v42
  %v44 = vsel %vm38, %v43, %v42
  %vm45 = vcmp.lt.s32.totalorder %v29, 0
  %v46 = vsub.s32 0, %v29
  %v47 = vsel %vm45, %v46, %v29
  %v48 = vshrl.u32 %v47, 4
  %v49 = vand.u32 %v47, 15
  %v50 = vsub.s32 0, %v49
  %v51 = vsel %vm45, %v50, %v49
  %vm52 = vcmp.lt.s32.totalorder %v30, 0
  %v53 = vsub.s32 0, %v30
  %v54 = vsel %vm52, %v53, %v30
  %v55 = vshrl.u32 %v54, 4
  %v56 = vand.u32 %v54, 15
  %v57 = vsub.s32 0, %v56
  %v58 = vsel %vm52, %v57, %v56
  %vm59 = vcmp.ne.s32.totalorder %v37, 0
  %vm60 = vcmp.ne.s32.totalorder %v44, 0
  %vm61 = vcmp.ne.s32.totalorder %v51, 0
  %vm62 = vcmp.ne.s32.totalorder %v58, 0
  %vm63 = vcmp.lt.s32.totalorder %v37, 0
  %vm64 = vcmp.lt.s32.totalorder %v44, 0
  %vm65 = vcmp.lt.s32.totalorder %v51, 0
  %vm66 = vcmp.lt.s32.totalorder %v58, 0
  %vm67 = vmand %vm63, %vm59
  %vm68 = vmand %vm64, %vm60
  %vm69 = vmand %vm65, %vm61
  %vm70 = vmand %vm66, %vm62
  %v71 = vadd.s32 %v37, 16
  %v72 = vadd.s32 %v44, 16
  %v73 = vadd.s32 %v51, 16
  %v74 = vadd.s32 %v58, 16
  %v75 = vsel %vm67, %v71, %v37
  %v76 = vsel %vm68, %v72, %v44
  %v77 = vsel %vm69, %v73, %v51
  %v78 = vsel %vm70, %v74, %v58
  %vm79 = vcmp.ne.s32.totalorder %v75, 0
  %vm80 = vcmp.ne.s32.totalorder %v76, 0
  %vm81 = vcmp.ne.s32.totalorder %v77, 0
  %vm82 = vcmp.ne.s32.totalorder %v78, 0
  %v83 = vsel %vm79, 1, 0
  %v84 = vsel %vm80, 1, 0
  %v85 = vsel %vm81, 1, 0
  %v86 = vsel %vm82, 1, 0
  %v87 = vcvt.s32.f32 %v83
  %v88 = vcvt.s32.f32 %v84
  %v89 = vcvt.s32.f32 %v85
  %v90 = vcvt.s32.f32 %v86
  %vm91 = vcmp.ne.s32.totalorder %v75, 15
  %vm92 = vcmp.ne.s32.totalorder %v76, 15
  %vm93 = vcmp.ne.s32.totalorder %v77, 15
  %vm94 = vcmp.ne.s32.totalorder %v78, 15
  %v95 = vsel %vm91, 1, 0
  %v96 = vsel %vm92, 1, 0
  %v97 = vsel %vm93, 1, 0
  %v98 = vsel %vm94, 1, 0
  %v99 = vcvt.s32.f32 %v95
  %v100 = vcvt.s32.f32 %v96
  %v101 = vcvt.s32.f32 %v97
  %v102 = vcvt.s32.f32 %v98
  %v103 = vadd.s32 %v27, 32
  %v104 = vadd.s32 %v27, 40
  %v105 = vadd.s32 %v27, 48
  %v106 = vadd.s32 %v27, 56
  %v107 = vadd.s32 %v27, 64
  %v108 = vadd.s32 %v27, 72
  %v109 = vadd.s32 %v27, 80
  %v110 = vadd.s32 %v27, 88
  %v111 = vadd.s32 %v27, 96
  %v112 = vadd.s32 %v27, 104
  %v113 = vadd.s32 %v27, 112
  %v114 = vadd.s32 %v27, 120
  %vm115 = vcmp.lt.s32.totalorder %v27, 0
  %v116 = vsub.s32 0, %v27
  %v117 = vsel %vm115, %v116, %v27
  %v118 = vshrl.u32 %v117, 3
  %v119 = vand.u32 %v117, 7
  %v120 = vsub.s32 0, %v119
  %v121 = vsel %vm115, %v120, %v119
  %vm122 = vcmp.lt.s32.totalorder %v28, 0
  %v123 = vsub.s32 0, %v28
  %v124 = vsel %vm122, %v123, %v28
  %v125 = vshrl.u32 %v124, 3
  %v126 = vand.u32 %v124, 7
  %v127 = vsub.s32 0, %v126
  %v128 = vsel %vm122, %v127, %v126
  %vm129 = vcmp.lt.s32.totalorder %v29, 0
  %v130 = vsub.s32 0, %v29
  %v131 = vsel %vm129, %v130, %v29
  %v132 = vshrl.u32 %v131, 3
  %v133 = vand.u32 %v131, 7
  %v134 = vsub.s32 0, %v133
  %v135 = vsel %vm129, %v134, %v133
  %vm136 = vcmp.lt.s32.totalorder %v30, 0
  %v137 = vsub.s32 0, %v30
  %v138 = vsel %vm136, %v137, %v30
  %v139 = vshrl.u32 %v138, 3
  %v140 = vand.u32 %v138, 7
  %v141 = vsub.s32 0, %v140
  %v142 = vsel %vm136, %v141, %v140
  %vm143 = vcmp.lt.s32.totalorder %v103, 0
  %v144 = vsub.s32 0, %v103
  %v145 = vsel %vm143, %v144, %v103
  %v146 = vshrl.u32 %v145, 3
  %v147 = vand.u32 %v145, 7
  %v148 = vsub.s32 0, %v147
  %v149 = vsel %vm143, %v148, %v147
  %vm150 = vcmp.lt.s32.totalorder %v104, 0
  %v151 = vsub.s32 0, %v104
  %v152 = vsel %vm150, %v151, %v104
  %v153 = vshrl.u32 %v152, 3
  %v154 = vand.u32 %v152, 7
  %v155 = vsub.s32 0, %v154
  %v156 = vsel %vm150, %v155, %v154
  %vm157 = vcmp.lt.s32.totalorder %v105, 0
  %v158 = vsub.s32 0, %v105
  %v159 = vsel %vm157, %v158, %v105
  %v160 = vshrl.u32 %v159, 3
  %v161 = vand.u32 %v159, 7
  %v162 = vsub.s32 0, %v161
  %v163 = vsel %vm157, %v162, %v161
  %vm164 = vcmp.lt.s32.totalorder %v106, 0
  %v165 = vsub.s32 0, %v106
  %v166 = vsel %vm164, %v165, %v106
  %v167 = vshrl.u32 %v166, 3
  %v168 = vand.u32 %v166, 7
  %v169 = vsub.s32 0, %v168
  %v170 = vsel %vm164, %v169, %v168
  %vm171 = vcmp.lt.s32.totalorder %v107, 0
  %v172 = vsub.s32 0, %v107
  %v173 = vsel %vm171, %v172, %v107
  %v174 = vshrl.u32 %v173, 3
  %v175 = vand.u32 %v173, 7
  %v176 = vsub.s32 0, %v175
  %v177 = vsel %vm171, %v176, %v175
  %vm178 = vcmp.lt.s32.totalorder %v108, 0
  %v179 = vsub.s32 0, %v108
  %v180 = vsel %vm178, %v179, %v108
  %v181 = vshrl.u32 %v180, 3
  %v182 = vand.u32 %v180, 7
  %v183 = vsub.s32 0, %v182
  %v184 = vsel %vm178, %v183, %v182
  %vm185 = vcmp.lt.s32.totalorder %v109, 0
  %v186 = vsub.s32 0, %v109
  %v187 = vsel %vm185, %v186, %v109
  %v188 = vshrl.u32 %v187, 3
  %v189 = vand.u32 %v187, 7
  %v190 = vsub.s32 0, %v189
  %v191 = vsel %vm185, %v190, %v189
  %vm192 = vcmp.lt.s32.totalorder %v110, 0
  %v193 = vsub.s32 0, %v110
  %v194 = vsel %vm192, %v193, %v110
  %v195 = vshrl.u32 %v194, 3
  %v196 = vand.u32 %v194, 7
  %v197 = vsub.s32 0, %v196
  %v198 = vsel %vm192, %v197, %v196
  %vm199 = vcmp.lt.s32.totalorder %v111, 0
  %v200 = vsub.s32 0, %v111
  %v201 = vsel %vm199, %v200, %v111
  %v202 = vshrl.u32 %v201, 3
  %v203 = vand.u32 %v201, 7
  %v204 = vsub.s32 0, %v203
  %v205 = vsel %vm199, %v204, %v203
  %vm206 = vcmp.lt.s32.totalorder %v112, 0
  %v207 = vsub.s32 0, %v112
  %v208 = vsel %vm206, %v207, %v112
  %v209 = vshrl.u32 %v208, 3
  %v210 = vand.u32 %v208, 7
  %v211 = vsub.s32 0, %v210
  %v212 = vsel %vm206, %v211, %v210
  %vm213 = vcmp.lt.s32.totalorder %v113, 0
  %v214 = vsub.s32 0, %v113
  %v215 = vsel %vm213, %v214, %v113
  %v216 = vshrl.u32 %v215, 3
  %v217 = vand.u32 %v215, 7
  %v218 = vsub.s32 0, %v217
  %v219 = vsel %vm213, %v218, %v217
  %vm220 = vcmp.lt.s32.totalorder %v114, 0
  %v221 = vsub.s32 0, %v114
  %v222 = vsel %vm220, %v221, %v114
  %v223 = vshrl.u32 %v222, 3
  %v224 = vand.u32 %v222, 7
  %v225 = vsub.s32 0, %v224
  %v226 = vsel %vm220, %v225, %v224
  %vm227 = vcmp.ne.s32.totalorder %v121, 0
  %vm228 = vcmp.ne.s32.totalorder %v128, 0
  %vm229 = vcmp.ne.s32.totalorder %v135, 0
  %vm230 = vcmp.ne.s32.totalorder %v142, 0
  %vm231 = vcmp.ne.s32.totalorder %v149, 0
  %vm232 = vcmp.ne.s32.totalorder %v156, 0
  %vm233 = vcmp.ne.s32.totalorder %v163, 0
  %vm234 = vcmp.ne.s32.totalorder %v170, 0
  %vm235 = vcmp.ne.s32.totalorder %v177, 0
  %vm236 = vcmp.ne.s32.totalorder %v184, 0
  %vm237 = vcmp.ne.s32.totalorder %v191, 0
  %vm238 = vcmp.ne.s32.totalorder %v198, 0
  %vm239 = vcmp.ne.s32.totalorder %v205, 0
  %vm240 = vcmp.ne.s32.totalorder %v212, 0
  %vm241 = vcmp.ne.s32.totalorder %v219, 0
  %vm242 = vcmp.ne.s32.totalorder %v226, 0
  %vm243 = vcmp.lt.s32.totalorder %v121, 0
  %vm244 = vcmp.lt.s32.totalorder %v128, 0
  %vm245 = vcmp.lt.s32.totalorder %v135, 0
  %vm246 = vcmp.lt.s32.totalorder %v142, 0
  %vm247 = vcmp.lt.s32.totalorder %v149, 0
  %vm248 = vcmp.lt.s32.totalorder %v156, 0
  %vm249 = vcmp.lt.s32.totalorder %v163, 0
  %vm250 = vcmp.lt.s32.totalorder %v170, 0
  %vm251 = vcmp.lt.s32.totalorder %v177, 0
  %vm252 = vcmp.lt.s32.totalorder %v184, 0
  %vm253 = vcmp.lt.s32.totalorder %v191, 0
  %vm254 = vcmp.lt.s32.totalorder %v198, 0
  %vm255 = vcmp.lt.s32.totalorder %v205, 0
  %vm256 = vcmp.lt.s32.totalorder %v212, 0
  %vm257 = vcmp.lt.s32.totalorder %v219, 0
  %vm258 = vcmp.lt.s32.totalorder %v226, 0
  %vm259 = vmand %vm243, %vm227
  %vm260 = vmand %vm244, %vm228
  %vm261 = vmand %vm245, %vm229
  %vm262 = vmand %vm246, %vm230
  %vm263 = vmand %vm247, %vm231
  %vm264 = vmand %vm248, %vm232
  %vm265 = vmand %vm249, %vm233
  %vm266 = vmand %vm250, %vm234
  %vm267 = vmand %vm251, %vm235
  %vm268 = vmand %vm252, %vm236
  %vm269 = vmand %vm253, %vm237
  %vm270 = vmand %vm254, %vm238
  %vm271 = vmand %vm255, %vm239
  %vm272 = vmand %vm256, %vm240
  %vm273 = vmand %vm257, %vm241
  %vm274 = vmand %vm258, %vm242
  %v275 = vadd.s32 %v121, 8
  %v276 = vadd.s32 %v128, 8
  %v277 = vadd.s32 %v135, 8
  %v278 = vadd.s32 %v142, 8
  %v279 = vadd.s32 %v149, 8
  %v280 = vadd.s32 %v156, 8
  %v281 = vadd.s32 %v163, 8
  %v282 = vadd.s32 %v170, 8
  %v283 = vadd.s32 %v177, 8
  %v284 = vadd.s32 %v184, 8
  %v285 = vadd.s32 %v191, 8
  %v286 = vadd.s32 %v198, 8
  %v287 = vadd.s32 %v205, 8
  %v288 = vadd.s32 %v212, 8
  %v289 = vadd.s32 %v219, 8
  %v290 = vadd.s32 %v226, 8
  %v291 = vsel %vm259, %v275, %v121
  %v292 = vsel %vm260, %v276, %v128
  %v293 = vsel %vm261, %v277, %v135
  %v294 = vsel %vm262, %v278, %v142
  %v295 = vsel %vm263, %v279, %v149
  %v296 = vsel %vm264, %v280, %v156
  %v297 = vsel %vm265, %v281, %v163
  %v298 = vsel %vm266, %v282, %v170
  %v299 = vsel %vm267, %v283, %v177
  %v300 = vsel %vm268, %v284, %v184
  %v301 = vsel %vm269, %v285, %v191
  %v302 = vsel %vm270, %v286, %v198
  %v303 = vsel %vm271, %v287, %v205
  %v304 = vsel %vm272, %v288, %v212
  %v305 = vsel %vm273, %v289, %v219
  %v306 = vsel %vm274, %v290, %v226
  %v307 = vlaneseq
  %v308 = vand.u32 %v307, 127
  %vm309 = vcmp.eq.s32.totalorder %v291, %v308
  %vm310 = vcmp.eq.s32.totalorder %v292, %v308
  %vm311 = vcmp.eq.s32.totalorder %v293, %v308
  %vm312 = vcmp.eq.s32.totalorder %v294, %v308
  %vm313 = vcmp.eq.s32.totalorder %v295, %v308
  %vm314 = vcmp.eq.s32.totalorder %v296, %v308
  %vm315 = vcmp.eq.s32.totalorder %v297, %v308
  %vm316 = vcmp.eq.s32.totalorder %v298, %v308
  %vm317 = vcmp.eq.s32.totalorder %v299, %v308
  %vm318 = vcmp.eq.s32.totalorder %v300, %v308
  %vm319 = vcmp.eq.s32.totalorder %v301, %v308
  %vm320 = vcmp.eq.s32.totalorder %v302, %v308
  %vm321 = vcmp.eq.s32.totalorder %v303, %v308
  %vm322 = vcmp.eq.s32.totalorder %v304, %v308
  %vm323 = vcmp.eq.s32.totalorder %v305, %v308
  %vm324 = vcmp.eq.s32.totalorder %v306, %v308
  %v325 = vsel %vm309, 1, 0
  %v326 = vsel %vm310, 1, 0
  %v327 = vsel %vm311, 1, 0
  %v328 = vsel %vm312, 1, 0
  %v329 = vsel %vm313, 1, 0
  %v330 = vsel %vm314, 1, 0
  %v331 = vsel %vm315, 1, 0
  %v332 = vsel %vm316, 1, 0
  %v333 = vsel %vm317, 1, 0
  %v334 = vsel %vm318, 1, 0
  %v335 = vsel %vm319, 1, 0
  %v336 = vsel %vm320, 1, 0
  %v337 = vsel %vm321, 1, 0
  %v338 = vsel %vm322, 1, 0
  %v339 = vsel %vm323, 1, 0
  %v340 = vsel %vm324, 1, 0
  %v341 = vcvt.s32.f32 %v325
  %v342 = vcvt.s32.f32 %v326
  %v343 = vcvt.s32.f32 %v327
  %v344 = vcvt.s32.f32 %v328
  %v345 = vcvt.s32.f32 %v329
  %v346 = vcvt.s32.f32 %v330
  %v347 = vcvt.s32.f32 %v331
  %v348 = vcvt.s32.f32 %v332
  %v349 = vcvt.s32.f32 %v333
  %v350 = vcvt.s32.f32 %v334
  %v351 = vcvt.s32.f32 %v335
  %v352 = vcvt.s32.f32 %v336
  %v353 = vcvt.s32.f32 %v337
  %v354 = vcvt.s32.f32 %v338
  %v355 = vcvt.s32.f32 %v339
  %v356 = vcvt.s32.f32 %v340
  %vm357 = vcmp.lt.s32.totalorder %v308, 0
  %v358 = vsub.s32 0, %v308
  %v359 = vsel %vm357, %v358, %v308
  %v360 = vshrl.u32 %v359, 3
  %v361 = vand.u32 %v359, 7
  %v362 = vsub.s32 0, %v361
  %v363 = vsel %vm357, %v362, %v361
  %vm364 = vcmp.ne.s32.totalorder %v363, 0
  %vm365 = vcmp.lt.s32.totalorder %v363, 0
  %vm366 = vmand %vm365, %vm364
  %v367 = vadd.s32 %v363, 8
  %v368 = vsel %vm366, %v367, %v363
  %vm369 = vcmp.eq.s32.totalorder %v368, %v27
  %v370 = vsel %vm369, 1, 0
  %v371 = vcvt.s32.f32 %v370
  %v372 = vld [vmem:[%s0] sm:$0xff]
  %v373 = vld [vmem:[%s0 + $0x8] sm:$0xff]
  %v374 = vld [vmem:[%s0 + $0x10] sm:$0xff]
  %v375 = vld [vmem:[%s0 + $0x18] sm:$0xff]
  %v376 = vld [vmem:[%s1 + $0x80] sm:$0xff]
  %v377 = vld [vmem:[%s1 + $0x88] sm:$0xff]
  %v378 = vld [vmem:[%s1 + $0x90] sm:$0xff]
  %v379 = vld [vmem:[%s1 + $0x98] sm:$0xff]
  %v380 = vld [vmem:[%s1 + $0xa0] sm:$0xff]
  %v381 = vld [vmem:[%s1 + $0xa8] sm:$0xff]
  %v382 = vld [vmem:[%s1 + $0xb0] sm:$0xff]
  %v383 = vld [vmem:[%s1 + $0xb8] sm:$0xff]
  %v384 = vld [vmem:[%s1 + $0xc0] sm:$0xff]
  %v385 = vld [vmem:[%s1 + $0xc8] sm:$0xff]
  %v386 = vld [vmem:[%s1 + $0xd0] sm:$0xff]
  %v387 = vld [vmem:[%s1 + $0xd8] sm:$0xff]
  %v388 = vld [vmem:[%s1 + $0xe0] sm:$0xff]
  %v389 = vld [vmem:[%s1 + $0xe8] sm:$0xff]
  %v390 = vld [vmem:[%s1 + $0xf0] sm:$0xff]
  %v391 = vld [vmem:[%s1 + $0xf8] sm:$0xff]
  %v392 = vrot.slane %v372, 7
  %v393 = vrot.slane %v373, 7
  %v394 = vrot.slane %v374, 7
  %v395 = vrot.slane %v375, 7
  %vm396 = vcmp.lt.s32.totalorder %v27, 1
  %v397 = vsel %vm396, %v394, %v395
  %v398 = vsel %vm396, %v393, %v394
  %v399 = vsel %vm396, %v392, %v393
  %v400 = vsel %vm396, %v395, %v392
  %v401 = vmul.f32 %v400, %v87
  %v402 = vmul.f32 %v399, %v88
  %v403 = vmul.f32 %v398, %v89
  %v404 = vmul.f32 %v397, %v90
  %v405 = vld [vmem:[%s1] sm:$0xff]
  %v406 = vld [vmem:[%s1 + $0x8] sm:$0xff]
  %v407 = vld [vmem:[%s1 + $0x10] sm:$0xff]
  %v408 = vld [vmem:[%s1 + $0x18] sm:$0xff]
  %v409 = vld [vmem:[%s1 + $0x20] sm:$0xff]
  %v410 = vld [vmem:[%s1 + $0x28] sm:$0xff]
  %v411 = vld [vmem:[%s1 + $0x30] sm:$0xff]
  %v412 = vld [vmem:[%s1 + $0x38] sm:$0xff]
  %v413 = vld [vmem:[%s1 + $0x40] sm:$0xff]
  %v414 = vld [vmem:[%s1 + $0x48] sm:$0xff]
  %v415 = vld [vmem:[%s1 + $0x50] sm:$0xff]
  %v416 = vld [vmem:[%s1 + $0x58] sm:$0xff]
  %v417 = vld [vmem:[%s1 + $0x60] sm:$0xff]
  %v418 = vld [vmem:[%s1 + $0x68] sm:$0xff]
  %v419 = vld [vmem:[%s1 + $0x70] sm:$0xff]
  %v420 = vld [vmem:[%s1 + $0x78] sm:$0xff]
  %421 = vmatpush.msra.mxu0 %v420
  %422 = vmatpush.msra.mxu0 %v419
  %423 = vmatpush.msra.mxu0 %v418
  %424 = vmatpush.msra.mxu0 %v417
  %425 = vmatpush.msra.mxu0 %v416
  %426 = vmatpush.msra.mxu0 %v415
  %427 = vmatpush.msra.mxu0 %v414
  %428 = vmatpush.msra.mxu0 %v413
  %429 = vmatpush.msra.mxu0 %v412
  %430 = vmatpush.msra.mxu0 %v411
  %431 = vmatpush.msra.mxu0 %v410
  %432 = vmatpush.msra.mxu0 %v409
  %433 = vmatpush.msra.mxu0 %v408
  %434 = vmatpush.msra.mxu0 %v407
  %435 = vmatpush.msra.mxu0 %v406
  %436 = vmatpush.msra.mxu0 %v405
  %437 = vmatmul.f32.gmra.mxu0 %v401
  %v438 = vpop.f32.mrf.mxu0
  %v439 = vadd.f32 0.0, %v438
  %440 = vmatmul.f32.gmra.mxu0 %v402
  %v441 = vpop.f32.mrf.mxu0
  %v442 = vadd.f32 0.0, %v441
  %443 = vmatmul.f32.gmra.mxu0 %v403
  %v444 = vpop.f32.mrf.mxu0
  %v445 = vadd.f32 0.0, %v444
  %446 = vmatmul.f32.gmra.mxu0 %v404
  %v447 = vpop.f32.mrf.mxu0
  %v448 = vadd.f32 0.0, %v447
  %449 = vdwg.mxu0
  %450 = vmatpush.msra.mxu0 %v391
  %451 = vmatpush.msra.mxu0 %v390
  %452 = vmatpush.msra.mxu0 %v389
  %453 = vmatpush.msra.mxu0 %v388
  %454 = vmatpush.msra.mxu0 %v387
  %455 = vmatpush.msra.mxu0 %v386
  %456 = vmatpush.msra.mxu0 %v385
  %457 = vmatpush.msra.mxu0 %v384
  %458 = vmatpush.msra.mxu0 %v383
  %459 = vmatpush.msra.mxu0 %v382
  %460 = vmatpush.msra.mxu0 %v381
  %461 = vmatpush.msra.mxu0 %v380
  %462 = vmatpush.msra.mxu0 %v379
  %463 = vmatpush.msra.mxu0 %v378
  %464 = vmatpush.msra.mxu0 %v377
  %465 = vmatpush.msra.mxu0 %v376
  %466 = vmatmul.f32.gmra.mxu0 %v372
  %v467 = vpop.f32.mrf.mxu0
  %v468 = vadd.f32 %v439, %v467
  %469 = vmatmul.f32.gmra.mxu0 %v373
  %v470 = vpop.f32.mrf.mxu0
  %v471 = vadd.f32 %v442, %v470
  %472 = vmatmul.f32.gmra.mxu0 %v374
  %v473 = vpop.f32.mrf.mxu0
  %v474 = vadd.f32 %v445, %v473
  %475 = vmatmul.f32.gmra.mxu0 %v375
  %v476 = vpop.f32.mrf.mxu0
  %v477 = vadd.f32 %v448, %v476
  %478 = vdwg.mxu0
  %v479 = vrot.slane %v372, 1
  %v480 = vrot.slane %v373, 1
  %v481 = vrot.slane %v374, 1
  %v482 = vrot.slane %v375, 1
  %vm483 = vcmp.lt.s32.totalorder %v27, 7
  %v484 = vsel %vm483, %v481, %v482
  %v485 = vsel %vm483, %v480, %v481
  %v486 = vsel %vm483, %v479, %v480
  %v487 = vsel %vm483, %v482, %v479
  %v488 = vmul.f32 %v486, %v99
  %v489 = vmul.f32 %v485, %v100
  %v490 = vmul.f32 %v484, %v101
  %v491 = vmul.f32 %v487, %v102
  %v492 = vld [vmem:[%s1 + $0x100] sm:$0xff]
  %v493 = vld [vmem:[%s1 + $0x108] sm:$0xff]
  %v494 = vld [vmem:[%s1 + $0x110] sm:$0xff]
  %v495 = vld [vmem:[%s1 + $0x118] sm:$0xff]
  %v496 = vld [vmem:[%s1 + $0x120] sm:$0xff]
  %v497 = vld [vmem:[%s1 + $0x128] sm:$0xff]
  %v498 = vld [vmem:[%s1 + $0x130] sm:$0xff]
  %v499 = vld [vmem:[%s1 + $0x138] sm:$0xff]
  %v500 = vld [vmem:[%s1 + $0x140] sm:$0xff]
  %v501 = vld [vmem:[%s1 + $0x148] sm:$0xff]
  %v502 = vld [vmem:[%s1 + $0x150] sm:$0xff]
  %v503 = vld [vmem:[%s1 + $0x158] sm:$0xff]
  %v504 = vld [vmem:[%s1 + $0x160] sm:$0xff]
  %v505 = vld [vmem:[%s1 + $0x168] sm:$0xff]
  %v506 = vld [vmem:[%s1 + $0x170] sm:$0xff]
  %v507 = vld [vmem:[%s1 + $0x178] sm:$0xff]
  %508 = vmatpush.msra.mxu0 %v507
  %509 = vmatpush.msra.mxu0 %v506
  %510 = vmatpush.msra.mxu0 %v505
  %511 = vmatpush.msra.mxu0 %v504
  %512 = vmatpush.msra.mxu0 %v503
  %513 = vmatpush.msra.mxu0 %v502
  %514 = vmatpush.msra.mxu0 %v501
  %515 = vmatpush.msra.mxu0 %v500
  %516 = vmatpush.msra.mxu0 %v499
  %517 = vmatpush.msra.mxu0 %v498
  %518 = vmatpush.msra.mxu0 %v497
  %519 = vmatpush.msra.mxu0 %v496
  %520 = vmatpush.msra.mxu0 %v495
  %521 = vmatpush.msra.mxu0 %v494
  %522 = vmatpush.msra.mxu0 %v493
  %523 = vmatpush.msra.mxu0 %v492
  %524 = vmatmul.f32.gmra.mxu0 %v488
  %v525 = vpop.f32.mrf.mxu0
  %v526 = vadd.f32 0.0, %v525
  %527 = vmatmul.f32.gmra.mxu0 %v489
  %v528 = vpop.f32.mrf.mxu0
  %v529 = vadd.f32 0.0, %v528
  %530 = vmatmul.f32.gmra.mxu0 %v490
  %v531 = vpop.f32.mrf.mxu0
  %v532 = vadd.f32 0.0, %v531
  %533 = vmatmul.f32.gmra.mxu0 %v491
  %v534 = vpop.f32.mrf.mxu0
  %v535 = vadd.f32 0.0, %v534
  %536 = vdwg.mxu0
  %v537 = vadd.f32 %v468, %v526
  %v538 = vadd.f32 %v471, %v529
  %v539 = vadd.f32 %v474, %v532
  %v540 = vadd.f32 %v477, %v535
  %v541 = vadd.f32 %v537, %v538
  %v542 = vadd.f32 %v541, %v539
  %v543 = vadd.f32 %v542, %v540
  %v544 = vrot.slane %v543, 4
  %v545 = vadd.f32 %v543, %v544
  %v546 = vrot.slane %v545, 2
  %v547 = vadd.f32 %v545, %v546
  %v548 = vrot.slane %v547, 1
  %v549 = vadd.f32 %v547, %v548
  %v550 = vmul.f32 %v537, %v537
  %v551 = vmul.f32 %v538, %v538
  %v552 = vmul.f32 %v539, %v539
  %v553 = vmul.f32 %v540, %v540
  %v554 = vadd.f32 %v550, %v551
  %v555 = vadd.f32 %v554, %v552
  %v556 = vadd.f32 %v555, %v553
  %v557 = vrot.slane %v556, 4
  %v558 = vadd.f32 %v556, %v557
  %v559 = vrot.slane %v558, 2
  %v560 = vadd.f32 %v558, %v559
  %v561 = vrot.slane %v560, 1
  %v562 = vadd.f32 %v560, %v561
  %vm563 = vcmask 1040384
  %v564 = vsel %vm563, %v549, %v562
  %565 = vmatpush.msra.mxu0 %v356
  %566 = vmatpush.msra.mxu0 %v355
  %567 = vmatpush.msra.mxu0 %v354
  %568 = vmatpush.msra.mxu0 %v353
  %569 = vmatpush.msra.mxu0 %v352
  %570 = vmatpush.msra.mxu0 %v351
  %571 = vmatpush.msra.mxu0 %v350
  %572 = vmatpush.msra.mxu0 %v349
  %573 = vmatpush.msra.mxu0 %v348
  %574 = vmatpush.msra.mxu0 %v347
  %575 = vmatpush.msra.mxu0 %v346
  %576 = vmatpush.msra.mxu0 %v345
  %577 = vmatpush.msra.mxu0 %v344
  %578 = vmatpush.msra.mxu0 %v343
  %579 = vmatpush.msra.mxu0 %v342
  %580 = vmatpush.msra.mxu0 %v341
  %581 = vmatmul.f32.gmra.mxu0 %v564
  %v582 = vpop.f32.mrf.mxu0
  %v583 = vadd.f32 0.0, %v582
  %584 = vdwg.mxu0
  %v585 = vmul.f32 %v583, 0.001953125
  %v586 = vmul.f32 %v585, %v585
  %v588 = vrot.slane %v586, 7
  %v590 = vsub.f32 %v585, %v588
  %v591 = vld [vmem:[%s2] sm:$0x1]
  %v592 = vadd.f32 %v590, 1e-05
  %v593 = vrsqrt.pop %v592
  %v594 = vmul.f32 %v593, %v592
  %v595 = vmul.f32 %v594, %v593
  %v596 = vmul.f32 0.5, %v595
  %v597 = vsub.f32 1.5, %v596
  %v598 = vmul.f32 %v593, %v597
  %vm599 = vweird.f32 %v592
  %vm600 = vweird.f32 %v593
  %vm601 = vmor %vm599, %vm600
  %v602 = vsel %vm601, %v593, %v598
  %604 = vst [vmem:[#allocation1] sm:$0xff] %v602
  %s605 = scalar_lea.vmem [#allocation1], 1
  %v606 = vld [vmem:[%s605] ss:$9 sm:$0xff]
  %v608 = vmul.f32 %v591, %v606
  %v609 = vld [vmem:[%s3] sm:$0x1]
  %v610 = vmul.f32 %v585, %v608
  %v611 = vsub.f32 %v609, %v610
  %v613 = vperm.slane %v611, 0
  %v615 = vsel %vm563, %v608, %v613
  %vm616 = vcmask 64512
  %v618 = vsel %vm616, %v615, 0
  %620 = vmatpush.msra.mxu0 0.0
  %621 = vmatpush.msra.mxu0 0.0
  %622 = vmatpush.msra.mxu0 0.0
  %623 = vmatpush.msra.mxu0 0.0
  %624 = vmatpush.msra.mxu0 0.0
  %625 = vmatpush.msra.mxu0 0.0
  %626 = vmatpush.msra.mxu0 0.0
  %627 = vmatpush.msra.mxu0 0.0
  %628 = vmatpush.msra.mxu0 0.0
  %629 = vmatpush.msra.mxu0 0.0
  %630 = vmatpush.msra.mxu0 0.0
  %631 = vmatpush.msra.mxu0 0.0
  %632 = vmatpush.msra.mxu0 0.0
  %633 = vmatpush.msra.mxu0 0.0
  %634 = vmatpush.msra.mxu0 0.0
  %635 = vmatpush.msra.mxu0 %v371
  %636 = vmatmul.f32.gmra.mxu0 %v618
  %v637 = vpop.f32.mrf.mxu0
  %v638 = vadd.f32 0.0, %v637
  %639 = vdwg.mxu0
  %v640 = vperm.slane %v638, 0
  %v641 = vmul.f32 %v537, %v640
  %v642 = vmul.f32 %v538, %v640
  %v643 = vmul.f32 %v539, %v640
  %v644 = vmul.f32 %v540, %v640
  %v645 = vperm.slane %v638, 1
  %v646 = vadd.f32 %v641, %v645
  %v647 = vadd.f32 %v642, %v645
  %v648 = vadd.f32 %v643, %v645
  %v649 = vadd.f32 %v644, %v645
  %v650 = vmax.f32 %v646, 0.0
  %v651 = vmax.f32 %v647, 0.0
  %v652 = vmax.f32 %v648, 0.0
  %v653 = vmax.f32 %v649, 0.0
  %v654 = vld [vmem:[%s4 + $0x80] sm:$0xff]
  %v655 = vld [vmem:[%s4 + $0x88] sm:$0xff]
  %v656 = vld [vmem:[%s4 + $0x90] sm:$0xff]
  %v657 = vld [vmem:[%s4 + $0x98] sm:$0xff]
  %v658 = vld [vmem:[%s4 + $0xa0] sm:$0xff]
  %v659 = vld [vmem:[%s4 + $0xa8] sm:$0xff]
  %v660 = vld [vmem:[%s4 + $0xb0] sm:$0xff]
  %v661 = vld [vmem:[%s4 + $0xb8] sm:$0xff]
  %v662 = vld [vmem:[%s4 + $0xc0] sm:$0xff]
  %v663 = vld [vmem:[%s4 + $0xc8] sm:$0xff]
  %v664 = vld [vmem:[%s4 + $0xd0] sm:$0xff]
  %v665 = vld [vmem:[%s4 + $0xd8] sm:$0xff]
  %v666 = vld [vmem:[%s4 + $0xe0] sm:$0xff]
  %v667 = vld [vmem:[%s4 + $0xe8] sm:$0xff]
  %v668 = vld [vmem:[%s4 + $0xf0] sm:$0xff]
  %v669 = vld [vmem:[%s4 + $0xf8] sm:$0xff]
  %v670 = vrot.slane %v650, 7
  %v671 = vrot.slane %v651, 7
  %v672 = vrot.slane %v652, 7
  %v673 = vrot.slane %v653, 7
  %v674 = vsel %vm396, %v672, %v673
  %v675 = vsel %vm396, %v671, %v672
  %v676 = vsel %vm396, %v670, %v671
  %v677 = vsel %vm396, %v673, %v670
  %v678 = vmul.f32 %v677, %v87
  %v679 = vmul.f32 %v676, %v88
  %v680 = vmul.f32 %v675, %v89
  %v681 = vmul.f32 %v674, %v90
  %v682 = vld [vmem:[%s4] sm:$0xff]
  %v683 = vld [vmem:[%s4 + $0x8] sm:$0xff]
  %v684 = vld [vmem:[%s4 + $0x10] sm:$0xff]
  %v685 = vld [vmem:[%s4 + $0x18] sm:$0xff]
  %v686 = vld [vmem:[%s4 + $0x20] sm:$0xff]
  %v687 = vld [vmem:[%s4 + $0x28] sm:$0xff]
  %v688 = vld [vmem:[%s4 + $0x30] sm:$0xff]
  %v689 = vld [vmem:[%s4 + $0x38] sm:$0xff]
  %v690 = vld [vmem:[%s4 + $0x40] sm:$0xff]
  %v691 = vld [vmem:[%s4 + $0x48] sm:$0xff]
  %v692 = vld [vmem:[%s4 + $0x50] sm:$0xff]
  %v693 = vld [vmem:[%s4 + $0x58] sm:$0xff]
  %v694 = vld [vmem:[%s4 + $0x60] sm:$0xff]
  %v695 = vld [vmem:[%s4 + $0x68] sm:$0xff]
  %v696 = vld [vmem:[%s4 + $0x70] sm:$0xff]
  %v697 = vld [vmem:[%s4 + $0x78] sm:$0xff]
  %698 = vmatpush.msra.mxu0 %v697
  %699 = vmatpush.msra.mxu0 %v696
  %700 = vmatpush.msra.mxu0 %v695
  %701 = vmatpush.msra.mxu0 %v694
  %702 = vmatpush.msra.mxu0 %v693
  %703 = vmatpush.msra.mxu0 %v692
  %704 = vmatpush.msra.mxu0 %v691
  %705 = vmatpush.msra.mxu0 %v690
  %706 = vmatpush.msra.mxu0 %v689
  %707 = vmatpush.msra.mxu0 %v688
  %708 = vmatpush.msra.mxu0 %v687
  %709 = vmatpush.msra.mxu0 %v686
  %710 = vmatpush.msra.mxu0 %v685
  %711 = vmatpush.msra.mxu0 %v684
  %712 = vmatpush.msra.mxu0 %v683
  %713 = vmatpush.msra.mxu0 %v682
  %714 = vmatmul.f32.gmra.mxu0 %v678
  %v715 = vpop.f32.mrf.mxu0
  %v716 = vadd.f32 0.0, %v715
  %717 = vmatmul.f32.gmra.mxu0 %v679
  %v718 = vpop.f32.mrf.mxu0
  %v719 = vadd.f32 0.0, %v718
  %720 = vmatmul.f32.gmra.mxu0 %v680
  %v721 = vpop.f32.mrf.mxu0
  %v722 = vadd.f32 0.0, %v721
  %723 = vmatmul.f32.gmra.mxu0 %v681
  %v724 = vpop.f32.mrf.mxu0
  %v725 = vadd.f32 0.0, %v724
  %726 = vdwg.mxu0
  %727 = vmatpush.msra.mxu0 %v669
  %728 = vmatpush.msra.mxu0 %v668
  %729 = vmatpush.msra.mxu0 %v667
  %730 = vmatpush.msra.mxu0 %v666
  %731 = vmatpush.msra.mxu0 %v665
  %732 = vmatpush.msra.mxu0 %v664
  %733 = vmatpush.msra.mxu0 %v663
  %734 = vmatpush.msra.mxu0 %v662
  %735 = vmatpush.msra.mxu0 %v661
  %736 = vmatpush.msra.mxu0 %v660
  %737 = vmatpush.msra.mxu0 %v659
  %738 = vmatpush.msra.mxu0 %v658
  %739 = vmatpush.msra.mxu0 %v657
  %740 = vmatpush.msra.mxu0 %v656
  %741 = vmatpush.msra.mxu0 %v655
  %742 = vmatpush.msra.mxu0 %v654
  %743 = vmatmul.f32.gmra.mxu0 %v650
  %v744 = vpop.f32.mrf.mxu0
  %v745 = vadd.f32 %v716, %v744
  %746 = vmatmul.f32.gmra.mxu0 %v651
  %v747 = vpop.f32.mrf.mxu0
  %v748 = vadd.f32 %v719, %v747
  %749 = vmatmul.f32.gmra.mxu0 %v652
  %v750 = vpop.f32.mrf.mxu0
  %v751 = vadd.f32 %v722, %v750
  %752 = vmatmul.f32.gmra.mxu0 %v653
  %v753 = vpop.f32.mrf.mxu0
  %v754 = vadd.f32 %v725, %v753
  %755 = vdwg.mxu0
  %v756 = vrot.slane %v650, 1
  %v757 = vrot.slane %v651, 1
  %v758 = vrot.slane %v652, 1
  %v759 = vrot.slane %v653, 1
  %v760 = vsel %vm483, %v758, %v759
  %v761 = vsel %vm483, %v757, %v758
  %v762 = vsel %vm483, %v756, %v757
  %v763 = vsel %vm483, %v759, %v756
  %v764 = vmul.f32 %v762, %v99
  %v765 = vmul.f32 %v761, %v100
  %v766 = vmul.f32 %v760, %v101
  %v767 = vmul.f32 %v763, %v102
  %v768 = vld [vmem:[%s4 + $0x100] sm:$0xff]
  %v769 = vld [vmem:[%s4 + $0x108] sm:$0xff]
  %v770 = vld [vmem:[%s4 + $0x110] sm:$0xff]
  %v771 = vld [vmem:[%s4 + $0x118] sm:$0xff]
  %v772 = vld [vmem:[%s4 + $0x120] sm:$0xff]
  %v773 = vld [vmem:[%s4 + $0x128] sm:$0xff]
  %v774 = vld [vmem:[%s4 + $0x130] sm:$0xff]
  %v775 = vld [vmem:[%s4 + $0x138] sm:$0xff]
  %v776 = vld [vmem:[%s4 + $0x140] sm:$0xff]
  %v777 = vld [vmem:[%s4 + $0x148] sm:$0xff]
  %v778 = vld [vmem:[%s4 + $0x150] sm:$0xff]
  %v779 = vld [vmem:[%s4 + $0x158] sm:$0xff]
  %v780 = vld [vmem:[%s4 + $0x160] sm:$0xff]
  %v781 = vld [vmem:[%s4 + $0x168] sm:$0xff]
  %v782 = vld [vmem:[%s4 + $0x170] sm:$0xff]
  %v783 = vld [vmem:[%s4 + $0x178] sm:$0xff]
  %784 = vmatpush.msra.mxu0 %v783
  %785 = vmatpush.msra.mxu0 %v782
  %786 = vmatpush.msra.mxu0 %v781
  %787 = vmatpush.msra.mxu0 %v780
  %788 = vmatpush.msra.mxu0 %v779
  %789 = vmatpush.msra.mxu0 %v778
  %790 = vmatpush.msra.mxu0 %v777
  %791 = vmatpush.msra.mxu0 %v776
  %792 = vmatpush.msra.mxu0 %v775
  %793 = vmatpush.msra.mxu0 %v774
  %794 = vmatpush.msra.mxu0 %v773
  %795 = vmatpush.msra.mxu0 %v772
  %796 = vmatpush.msra.mxu0 %v771
  %797 = vmatpush.msra.mxu0 %v770
  %798 = vmatpush.msra.mxu0 %v769
  %799 = vmatpush.msra.mxu0 %v768
  %800 = vmatmul.f32.gmra.mxu0 %v764
  %v801 = vpop.f32.mrf.mxu0
  %v802 = vadd.f32 0.0, %v801
  %803 = vmatmul.f32.gmra.mxu0 %v765
  %v804 = vpop.f32.mrf.mxu0
  %v805 = vadd.f32 0.0, %v804
  %806 = vmatmul.f32.gmra.mxu0 %v766
  %v807 = vpop.f32.mrf.mxu0
  %v808 = vadd.f32 0.0, %v807
  %809 = vmatmul.f32.gmra.mxu0 %v767
  %v810 = vpop.f32.mrf.mxu0
  %v811 = vadd.f32 0.0, %v810
  %812 = vdwg.mxu0
  %v813 = vadd.f32 %v745, %v802
  %v814 = vadd.f32 %v748, %v805
  %v815 = vadd.f32 %v751, %v808
  %v816 = vadd.f32 %v754, %v811
  %v817 = vadd.f32 %v813, %v814
  %v818 = vadd.f32 %v817, %v815
  %v819 = vadd.f32 %v818, %v816
  %v820 = vrot.slane %v819, 4
  %v821 = vadd.f32 %v819, %v820
  %v822 = vrot.slane %v821, 2
  %v823 = vadd.f32 %v821, %v822
  %v824 = vrot.slane %v823, 1
  %v825 = vadd.f32 %v823, %v824
  %v826 = vmul.f32 %v813, %v813
  %v827 = vmul.f32 %v814, %v814
  %v828 = vmul.f32 %v815, %v815
  %v829 = vmul.f32 %v816, %v816
  %v830 = vadd.f32 %v826, %v827
  %v831 = vadd.f32 %v830, %v828
  %v832 = vadd.f32 %v831, %v829
  %v833 = vrot.slane %v832, 4
  %v834 = vadd.f32 %v832, %v833
  %v835 = vrot.slane %v834, 2
  %v836 = vadd.f32 %v834, %v835
  %v837 = vrot.slane %v836, 1
  %v838 = vadd.f32 %v836, %v837
  %v839 = vsel %vm563, %v825, %v838
  %840 = vmatpush.msra.mxu0 %v356
  %841 = vmatpush.msra.mxu0 %v355
  %842 = vmatpush.msra.mxu0 %v354
  %843 = vmatpush.msra.mxu0 %v353
  %844 = vmatpush.msra.mxu0 %v352
  %845 = vmatpush.msra.mxu0 %v351
  %846 = vmatpush.msra.mxu0 %v350
  %847 = vmatpush.msra.mxu0 %v349
  %848 = vmatpush.msra.mxu0 %v348
  %849 = vmatpush.msra.mxu0 %v347
  %850 = vmatpush.msra.mxu0 %v346
  %851 = vmatpush.msra.mxu0 %v345
  %852 = vmatpush.msra.mxu0 %v344
  %853 = vmatpush.msra.mxu0 %v343
  %854 = vmatpush.msra.mxu0 %v342
  %855 = vmatpush.msra.mxu0 %v341
  %856 = vmatmul.f32.gmra.mxu0 %v839
  %v857 = vpop.f32.mrf.mxu0
  %v858 = vadd.f32 0.0, %v857
  %859 = vdwg.mxu0
  %v860 = vmul.f32 %v858, 0.001953125
  %v861 = vmul.f32 %v860, %v860
  %v863 = vrot.slane %v861, 7
  %v865 = vsub.f32 %v860, %v863
  %v866 = vld [vmem:[%s5] sm:$0x1]
  %v867 = vadd.f32 %v865, 1e-05
  %v868 = vrsqrt.pop %v867
  %v869 = vmul.f32 %v868, %v867
  %v870 = vmul.f32 %v869, %v868
  %v871 = vmul.f32 0.5, %v870
  %v872 = vsub.f32 1.5, %v871
  %v873 = vmul.f32 %v868, %v872
  %vm874 = vweird.f32 %v867
  %vm875 = vweird.f32 %v868
  %vm876 = vmor %vm874, %vm875
  %v877 = vsel %vm876, %v868, %v873
  %879 = vst [vmem:[#allocation1] sm:$0xff] %v877
  %s880 = scalar_lea.vmem [#allocation1], 1
  %v881 = vld [vmem:[%s880] ss:$9 sm:$0xff]
  %v883 = vmul.f32 %v866, %v881
  %v884 = vld [vmem:[%s6] sm:$0x1]
  %v885 = vmul.f32 %v860, %v883
  %v886 = vsub.f32 %v884, %v885
  %v888 = vperm.slane %v886, 0
  %v890 = vsel %vm563, %v883, %v888
  %v892 = vsel %vm616, %v890, 0
  %894 = vmatpush.msra.mxu0 0.0
  %895 = vmatpush.msra.mxu0 0.0
  %896 = vmatpush.msra.mxu0 0.0
  %897 = vmatpush.msra.mxu0 0.0
  %898 = vmatpush.msra.mxu0 0.0
  %899 = vmatpush.msra.mxu0 0.0
  %900 = vmatpush.msra.mxu0 0.0
  %901 = vmatpush.msra.mxu0 0.0
  %902 = vmatpush.msra.mxu0 0.0
  %903 = vmatpush.msra.mxu0 0.0
  %904 = vmatpush.msra.mxu0 0.0
  %905 = vmatpush.msra.mxu0 0.0
  %906 = vmatpush.msra.mxu0 0.0
  %907 = vmatpush.msra.mxu0 0.0
  %908 = vmatpush.msra.mxu0 0.0
  %909 = vmatpush.msra.mxu0 %v371
  %910 = vmatmul.f32.gmra.mxu0 %v892
  %v911 = vpop.f32.mrf.mxu0
  %v912 = vadd.f32 0.0, %v911
  %913 = vdwg.mxu0
  %v914 = vperm.slane %v912, 0
  %v915 = vmul.f32 %v813, %v914
  %v916 = vmul.f32 %v814, %v914
  %v917 = vmul.f32 %v815, %v914
  %v918 = vmul.f32 %v816, %v914
  %v919 = vperm.slane %v912, 1
  %v920 = vadd.f32 %v915, %v919
  %v921 = vadd.f32 %v916, %v919
  %v922 = vadd.f32 %v917, %v919
  %v923 = vadd.f32 %v918, %v919
  %v924 = vadd.f32 %v920, %v372
  %v925 = vadd.f32 %v921, %v373
  %v926 = vadd.f32 %v922, %v374
  %v927 = vadd.f32 %v923, %v375
  %v928 = vmax.f32 %v924, 0.0
  %v929 = vmax.f32 %v925, 0.0
  %v930 = vmax.f32 %v926, 0.0
  %v931 = vmax.f32 %v927, 0.0
  %932 = vst [vmem:[%s7] sm:$0xff] %v928
  %933 = vst [vmem:[%s7 + $0x8] sm:$0xff] %v929
  %934 = vst [vmem:[%s7 + $0x10] sm:$0xff] %v930
  %935 = vst [vmem:[%s7 + $0x18] sm:$0xff] %v931
  // Predicated region
  $region30: #{resnet_block.1} parent=0 // pred_check
    _
  $region31: #{resnet_block.1} parent=0 // pred_check_branch
    %937 = sbr.rel (0) target = $region33
  $region32: #{resnet_block.1} parent=0 // pred_region
    _
  $region33: #{resnet_block.1} parent=0 // pred_fallthru
    _
  // Predicated region
  $region34: #{resnet_block.1} parent=0 // pred_check
    _
  $region35: #{resnet_block.1} parent=0 // pred_check_branch
    %939 = sbr.rel (0) target = $region37
  $region36: #{resnet_block.1} parent=0 // pred_region
    _
  $region37: #{resnet_block.1} parent=0 // pred_fallthru
    _

</llo_original>
